<compile_context>
chip_gen: v7x
topology: tpu7x:2x2x1
jax: 0.10.0
libtpu: 0.0.40
codegen_flags: <defaults>
</compile_context>

<pallas_src>
import functools

import jax
import jax.numpy as jnp
import numpy as np
from jax.experimental import pallas as pl
from jax.experimental.pallas import tpu as pltpu


# ---------------------------------------------------------------------------
# Kernels
# ---------------------------------------------------------------------------
def _edge_score_kernel_simple(hs_ref, hd_ref, w_ref, b_ref, out_ref, *, combine):
    """'average' / 'hadmard' combine -> Linear(h_feats, 1), lane-dense output.

    The N=1 matmul is replaced by a VPU multiply + lane reduction; the per-tile
    scores are written as a (1, tile_e) lane-dense row (not a (tile_e, 1)
    column, which would lower to masked 1-lane stores).
    """
    hs = hs_ref[...]                       # (tile_e, D) f32
    hd = hd_ref[...]
    if combine == "average":
        x = (hs + hd) * 0.5
    else:  # "hadmard"
        x = hs * hd
    # w_ref is the Linear weight stored as a (1, D) row; reduce over lanes.
    s = jnp.sum(x * w_ref[...], axis=-1) + b_ref[0, 0]      # (tile_e,)
    out_ref[...] = s[None, :]                                # (1, tile_e)


def _edge_score_kernel_concat(hs_ref, hd_ref, w1s_ref, w1d_ref, b1_ref,
                              w2_ref, b2_ref, out_ref):
    """concat([hs, hd]) -> Linear(2D, D) -> ReLU -> Linear(D, 1).

    concat folded into two matmuls: cat(hs, hd) @ W1 == hs @ W1[:D] + hd @ W1[D:].
    Final N=1 layer done as a VPU reduce; output written lane-dense.
    """
    h1 = (jnp.dot(hs_ref[...], w1s_ref[...], preferred_element_type=jnp.float32)
          + jnp.dot(hd_ref[...], w1d_ref[...], preferred_element_type=jnp.float32)
          + b1_ref[...])
    h1 = jnp.maximum(h1, 0.0)                                # ReLU
    s = jnp.sum(h1 * w2_ref[...], axis=-1) + b2_ref[0, 0]    # (tile_e,)
    out_ref[...] = s[None, :]                                # (1, tile_e)


# ---------------------------------------------------------------------------
# Tile-size selection
# ---------------------------------------------------------------------------
def _round_up(x, m):
    return ((x + m - 1) // m) * m


def _pick_tile_e(E, D, requested=None, itemsize=4,
                 vmem_budget=8 * 1024 * 1024, max_tile=8192):
    """Edge-tile size: big enough to amortize per-grid-step overhead, small
    enough that 2 inputs x 2 pipeline buffers stay well under the scoped-VMEM
    limit on every generation (incl. v7x's 64 MiB physical / 32 MiB scoped)."""
    e_rounded = _round_up(max(E, 1), 8)
    if requested is None:
        t = min(max_tile, max(128, vmem_budget // (4 * D * itemsize)))
        t = (t // 128) * 128
    else:
        t = max(8, (int(requested) // 8) * 8)
    if e_rounded <= t:
        return e_rounded                  # single block covers all edges
    return _round_up(t, 128)              # multi-block: keep output lane-dense


# ---------------------------------------------------------------------------
# Wrapper (pallas_call plumbing)
# ---------------------------------------------------------------------------
def ml_predictor_forward(params, src, dst, h, edge_combine_type, *, tile_e=None):
    """Equivalent of MLPredictor.forward(g, h) -> per-edge score of shape [E]."""
    E = int(src.shape[0])
    D = int(h.shape[1])

    tile = _pick_tile_e(E, D, tile_e)
    E_pad = _round_up(E, tile)
    num_tiles = E_pad // tile

    # Pad the *index* vectors (cheap) instead of the [E, D] feature arrays;
    # node 0 is always valid, and the padded rows are sliced off at the end.
    if E_pad != E:
        pad = E_pad - E
        src = jnp.concatenate([src, jnp.zeros((pad,), src.dtype)])
        dst = jnp.concatenate([dst, jnp.zeros((pad,), dst.dtype)])

    # Glue: gather per-edge endpoint features (edges.src['h'], edges.dst['h']).
    # TODO(synk): fuse this gather into the kernel (scalar-prefetch src/dst +
    # in-kernel DMA/row gather from h kept in pl.ANY) to cut HBM traffic ~2x,
    # and optionally stream hs/hd as bf16 with f32 accumulation.
    hs = h[src].astype(jnp.float32)   # [E_pad, D]
    hd = h[dst].astype(jnp.float32)   # [E_pad, D]

    grid = (num_tiles,)
    edge_spec = pl.BlockSpec((tile, D), lambda i: (i, 0))
    # Lane-dense output slab: one (1, tile) row of scores per grid step.
    out_spec = pl.BlockSpec((1, tile), lambda i: (0, i))
    out_shape = jax.ShapeDtypeStruct((1, E_pad), jnp.float32)
    cparams = pltpu.CompilerParams(dimension_semantics=("parallel",))
    smem_spec = pl.BlockSpec(memory_space=pltpu.MemorySpace.SMEM)

    if edge_combine_type in ("average", "hadmard"):
        w_row = params["w"].reshape(1, D).astype(jnp.float32)   # (1, D)
        b = params["b"].reshape(1, 1).astype(jnp.float32)       # (1, 1) scalar
        cost = pl.CostEstimate(
            flops=4 * E_pad * D,
            transcendentals=0,
            bytes_accessed=(2 * E_pad * D + E_pad + D + 1) * 4,
        )
        kern = functools.partial(_edge_score_kernel_simple, combine=edge_combine_type)
        out = pl.pallas_call(
            kern,
            out_shape=out_shape,
            grid_spec=pltpu.PrefetchScalarGridSpec(
                num_scalar_prefetch=0,
                grid=grid,
                in_specs=[
                    edge_spec,                                 # hs tile
                    edge_spec,                                 # hd tile
                    pl.BlockSpec((1, D), lambda i: (0, 0)),    # weight row (resident)
                    smem_spec,                                 # scalar bias in SMEM
                ],
                out_specs=out_spec,
            ),
            compiler_params=cparams,
            cost_estimate=cost,
        )(hs, hd, w_row, b)
    elif edge_combine_type == "concat":
        w1 = params["w1"].astype(jnp.float32)                   # (2D, D)
        w1s, w1d = w1[:D], w1[D:]                               # two (D, D) halves
        b1 = params["b1"].reshape(1, D).astype(jnp.float32)
        w2_row = params["w2"].reshape(1, D).astype(jnp.float32)  # (1, D)
        b2 = params["b2"].reshape(1, 1).astype(jnp.float32)
        cost = pl.CostEstimate(
            flops=4 * E_pad * D * D + 5 * E_pad * D,
            transcendentals=0,
            bytes_accessed=(2 * E_pad * D + E_pad + 2 * D * D + 2 * D + 1) * 4,
        )
        out = pl.pallas_call(
            _edge_score_kernel_concat,
            out_shape=out_shape,
            grid_spec=pltpu.PrefetchScalarGridSpec(
                num_scalar_prefetch=0,
                grid=grid,
                in_specs=[
                    edge_spec,                                 # hs tile
                    edge_spec,                                 # hd tile
                    pl.BlockSpec((D, D), lambda i: (0, 0)),    # W1[:D]  (resident)
                    pl.BlockSpec((D, D), lambda i: (0, 0)),    # W1[D:]  (resident)
                    pl.BlockSpec((1, D), lambda i: (0, 0)),    # b1      (resident)
                    pl.BlockSpec((1, D), lambda i: (0, 0)),    # W2 row  (resident)
                    smem_spec,                                 # scalar bias b2
                ],
                out_specs=out_spec,
            ),
            compiler_params=cparams,
            cost_estimate=cost,
        )(hs, hd, w1s, w1d, b1, w2_row, b2)
    else:
        raise ValueError(f"unknown edge_combine_type: {edge_combine_type}")

    # drop padding + .squeeze(1): matches the PyTorch module's output shape [E]
    return out[0, :E]


# ---------------------------------------------------------------------------
# Deterministic parameter init (mimics torch.nn.Linear uniform init)
# ---------------------------------------------------------------------------
def init_params(key, h_feats, edge_combine_type):
    if edge_combine_type in ("average", "hadmard"):
        k1, k2 = jax.random.split(key)
        bound = 1.0 / np.sqrt(h_feats)
        return {
            "w": jax.random.uniform(k1, (h_feats, 1), jnp.float32, -bound, bound),
            "b": jax.random.uniform(k2, (1, 1), jnp.float32, -bound, bound),
        }
    elif edge_combine_type == "concat":
        k1, k2, k3, k4 = jax.random.split(key, 4)
        bnd1 = 1.0 / np.sqrt(2 * h_feats)
        bnd2 = 1.0 / np.sqrt(h_feats)
        return {
            "w1": jax.random.uniform(
                k1, (2 * h_feats, h_feats), jnp.float32, -bnd1, bnd1
            ),
            "b1": jax.random.uniform(k2, (1, h_feats), jnp.float32, -bnd1, bnd1),
            "w2": jax.random.uniform(k3, (h_feats, 1), jnp.float32, -bnd2, bnd2),
            "b2": jax.random.uniform(k4, (1, 1), jnp.float32, -bnd2, bnd2),
        }
    raise ValueError(edge_combine_type)


# Pure-JAX reference for correctness checking.
def _reference(params, src, dst, h, edge_combine_type):
    hs, hd = h[src], h[dst]
    if edge_combine_type == "average":
        x = (hs + hd) * 0.5
        return jnp.sum(x * params["w"][:, 0], axis=-1) + params["b"][0, 0]
    if edge_combine_type == "hadmard":
        x = hs * hd
        return jnp.sum(x * params["w"][:, 0], axis=-1) + params["b"][0, 0]
    x = jnp.concatenate([hs, hd], axis=1)
    h1 = jnp.maximum(x @ params["w1"] + params["b1"], 0.0)
    return (h1 @ params["w2"] + params["b2"])[:, 0]


# ---------------------------------------------------------------------------
if __name__ == "__main__":
    key = jax.random.PRNGKey(0)
    k_h, k_src, k_dst, k_p, k_h2, k_s2, k_d2 = jax.random.split(key, 7)

    ok = True

    # Case 1: tiny graph (single tile, auto tile size).
    num_nodes, h_feats, num_edges = 16, 32, 8
    h = jax.random.normal(k_h, (num_nodes, h_feats), jnp.float32)
    src = jax.random.randint(k_src, (num_edges,), 0, num_nodes)
    dst = jax.random.randint(k_dst, (num_edges,), 0, num_nodes)
    for combine in ("average", "hadmard", "concat"):
        params = init_params(k_p, h_feats, combine)
        score = jax.block_until_ready(
            ml_predictor_forward(params, src, dst, h, combine))
        ref = _reference(params, src, dst, h, combine)
        ok &= (score.shape == (num_edges,))
        ok &= bool(np.allclose(np.asarray(score), np.asarray(ref),
                               atol=1e-4, rtol=1e-4))

    # Case 2: more edges with a forced small tile -> multi-tile grid,
    # lane-dense (1, tile) output blocks, megacore-parallel grid axis.
    num_nodes2, num_edges2 = 64, 300
    h2 = jax.random.normal(k_h2, (num_nodes2, h_feats), jnp.float32)
    src2 = jax.random.randint(k_s2, (num_edges2,), 0, num_nodes2)
    dst2 = jax.random.randint(k_d2, (num_edges2,), 0, num_nodes2)
    for combine in ("average", "hadmard", "concat"):
        params = init_params(k_p, h_feats, combine)
        score = jax.block_until_ready(
            ml_predictor_forward(params, src2, dst2, h2, combine, tile_e=128))
        ref = _reference(params, src2, dst2, h2, combine)
        ok &= (score.shape == (num_edges2,))
        ok &= bool(np.allclose(np.asarray(score), np.asarray(ref),
                               atol=1e-4, rtol=1e-4))

    if ok:
        print("KERNEL_OK")
    else:
        print("KERNEL_MISMATCH")
</pallas_src>

<mosaic_0001>
module attributes {stable_mosaic.version = 11 : i64} {
  func.func @_edge_score_kernel_simple(%arg0: i32, %arg1: memref<8x32xf32, #tpu.memory_space<vmem>>, %arg2: memref<8x32xf32, #tpu.memory_space<vmem>>, %arg3: memref<1x32xf32, #tpu.memory_space<vmem>>, %arg4: memref<1x1xf32, #tpu.memory_space<smem>>, %arg5: memref<1x8xf32, #tpu.memory_space<vmem>>) attributes {dimension_semantics = [#tpu.dimension_semantics<parallel>], iteration_bounds = array<i64: 1>, scalar_prefetch = 0 : i64, scratch_operands = 0 : i64, tpu.core_type = #tpu.core_type<tc>, window_params = [{transform_indices = @transform_0, window_bounds = array<i64: 8, 32>}, {transform_indices = @transform_1, window_bounds = array<i64: 8, 32>}, {pipeline_mode = #tpu.pipeline_mode<synchronous>, transform_indices = @transform_2, window_bounds = array<i64: 1, 32>}, {transform_indices = @transform_3, window_bounds = array<i64: 1, 1>}, {transform_indices = @transform_4, window_bounds = array<i64: 1, 8>}]} {
    %c0 = arith.constant 0 : index
    %c0_0 = arith.constant 0 : index
    %0 = vector.load %arg1[%c0, %c0_0] : memref<8x32xf32, #tpu.memory_space<vmem>>, vector<8x32xf32>
    %c0_1 = arith.constant 0 : index
    %c0_2 = arith.constant 0 : index
    %1 = vector.load %arg2[%c0_1, %c0_2] : memref<8x32xf32, #tpu.memory_space<vmem>>, vector<8x32xf32>
    %2 = arith.addf %0, %1 : vector<8x32xf32>
    %cst = arith.constant 5.000000e-01 : f32
    %3 = vector.broadcast %cst : f32 to vector<8x32xf32>
    %4 = arith.mulf %2, %3 : vector<8x32xf32>
    %c0_3 = arith.constant 0 : index
    %c0_4 = arith.constant 0 : index
    %5 = vector.load %arg3[%c0_3, %c0_4] : memref<1x32xf32, #tpu.memory_space<vmem>>, vector<1x32xf32>
    %6 = vector.broadcast %5 : vector<1x32xf32> to vector<8x32xf32>
    %7 = arith.mulf %4, %6 : vector<8x32xf32>
    %cst_5 = arith.constant dense<0.000000e+00> : vector<8xf32>
    %8 = vector.multi_reduction <add>, %7, %cst_5 [1] : vector<8x32xf32> to vector<8xf32>
    %c0_6 = arith.constant 0 : index
    %c0_7 = arith.constant 0 : index
    %9 = memref.load %arg4[%c0_6, %c0_7] : memref<1x1xf32, #tpu.memory_space<smem>>
    %10 = vector.broadcast %9 : f32 to vector<8xf32>
    %11 = arith.addf %8, %10 : vector<8xf32>
    %12 = vector.shape_cast %11 : vector<8xf32> to vector<1x8xf32>
    %c0_8 = arith.constant 0 : index
    %c0_9 = arith.constant 0 : index
    %13 = vector.load %arg5[%c0_8, %c0_9] : memref<1x8xf32, #tpu.memory_space<vmem>>, vector<1x8xf32>
    tpu.vector_store %arg5[%c0_8, %c0_9], %12 {strides = array<i32>} : memref<1x8xf32, #tpu.memory_space<vmem>>, vector<1x8xf32>,
    return
  }
  func.func @transform_0(%arg0: i32) -> (i32, i32) {
    %c0_i32 = arith.constant 0 : i32
    %c0_i32_0 = arith.constant 0 : i32
    return %arg0, %c0_i32 : i32, i32
  }
  func.func @transform_1(%arg0: i32) -> (i32, i32) {
    %c0_i32 = arith.constant 0 : i32
    %c0_i32_0 = arith.constant 0 : i32
    return %arg0, %c0_i32 : i32, i32
  }
  func.func @transform_2(%arg0: i32) -> (i32, i32) {
    %c0_i32 = arith.constant 0 : i32
    %c0_i32_0 = arith.constant 0 : i32
    %c0_i32_1 = arith.constant 0 : i32
    return %c0_i32, %c0_i32_0 : i32, i32
  }
  func.func @transform_3(%arg0: i32) -> (i32, i32) {
    %c0_i32 = arith.constant 0 : i32
    %c0_i32_0 = arith.constant 0 : i32
    %c0_i32_1 = arith.constant 0 : i32
    return %c0_i32, %c0_i32_0 : i32, i32
  }
  func.func @transform_4(%arg0: i32) -> (i32, i32) {
    %c0_i32 = arith.constant 0 : i32
    %c0_i32_0 = arith.constant 0 : i32
    return %c0_i32, %arg0 : i32, i32
  }
}

</mosaic_0001>

<llo_original>
// kernel: tpu_custom_call.1
$region0: #{tpu_custom_call.1}
  #allocation0 [shape = 'u32[]', space=smem, size = 0x4, offset = 0x4, fixed_abs, tag = 'smem constant byte address 0x4 - core index']
  #allocation1 [shape = 'u32[144,128]{1,0:T(1,128)}', space=vmem, size = 0x12000, scoped, tag = 'internal scratch']
  #allocation2 [shape = 'f32[1,1]{1,0:T(1,128)S(6)}', space=smem, size = 0x200, scoped, tag = 'scoped memory for tpu_custom_call.1']
  %s0 = inlined_call_operand.hbm [shape: f32[8,32], index: 0, kind: input, shape index: {}]
  %s1 = inlined_call_operand.hbm [shape: f32[8,32], index: 1, kind: input, shape index: {}]
  %s2 = inlined_call_operand.vmem [shape: f32[1,32], index: 2, kind: input, shape index: {}]
  %s3 = inlined_call_operand.<no memory space> [shape: f32[1,1], index: 3, kind: input, shape index: {}]
  %s4 = inlined_call_operand.hbm [shape: f32[1,8], index: 4, kind: output, shape index: {}]
  %s5 = sld [smem:[#allocation0]]
  $region34: #{tpu_custom_call.1} parent=0
    _
  %s7 = ssub.s32 1, %s5
  %s8 = scalar_select 0, %s7, %s5
  %9 = sst [smem:[#allocation2]] %s3
  $region1: #{tpu_custom_call.1} parent=0
    #allocation3 [shape = 'u8[4096]{0}', space=vmem, size = 0x1000, scoped, tag = 'input window, operand 0, single buffered']
    #allocation4 [shape = 's32[1]{0}', space=sflag, size = 0x4, scoped, tag = 'scoped memory for tpu_custom_call.1']
    #allocation5 [shape = 's32[1]{0}', space=sflag, size = 0x4, scoped, tag = 'scoped memory for tpu_custom_call.1']
    #allocation6 [shape = 'u8[4096]{0}', space=vmem, size = 0x1000, scoped, tag = 'input window, operand 1, single buffered']
    #allocation7 [shape = 's32[1]{0}', space=sflag, size = 0x4, scoped, tag = 'scoped memory for tpu_custom_call.1']
    #allocation8 [shape = 'u8[512]{0}', space=vmem, size = 0x400, scoped, tag = 'output window, operand 0, single buffered']
    %10 = vsyncpa [#allocation4], 0
    %11 = vsyncpa [#allocation7], 0
    %12 = vsyncpa [#allocation5], 0
    // Predicated region
    $region2: #{tpu_custom_call.1} parent=1 // pred_check
      _
    $region3: #{tpu_custom_call.1} parent=1 // pred_check_branch
      %14 = sbr.rel (0) target = $region5
    $region4: #{tpu_custom_call.1} parent=1 // pred_region
      %s16 = ssub.s32 128, 128
      %17 = vsyncadd [#allocation4], %s16
      %s19 = sshll.u32 [#allocation3], 4
      %s20 = int_to_ptr.vmem [resolvable:$true] %s19
      %22 = dma.hbm_to_vmem [thread:$0]  %s0, 128, %s20, [#allocation4]
    $region5: #{tpu_custom_call.1} parent=1 // pred_fallthru
      _
    // Predicated region
    $region6: #{tpu_custom_call.1} parent=1 // pred_check
      _
    $region7: #{tpu_custom_call.1} parent=1 // pred_check_branch
      %24 = sbr.rel (0) target = $region9
    $region8: #{tpu_custom_call.1} parent=1 // pred_region
      %s26 = ssub.s32 128, 128
      %27 = vsyncadd [#allocation7], %s26
      %s29 = sshll.u32 [#allocation6], 4
      %s30 = int_to_ptr.vmem [resolvable:$true] %s29
      %32 = dma.hbm_to_vmem [thread:$0]  %s1, 128, %s30, [#allocation7]
    $region9: #{tpu_custom_call.1} parent=1 // pred_fallthru
      _
    // Predicated region
    $region10: #{tpu_custom_call.1} parent=1 // pred_check
      _
    $region11: #{tpu_custom_call.1} parent=1 // pred_check_branch
      %34 = sbr.rel (0) target = $region13
    $region12: #{tpu_custom_call.1} parent=1 // pred_region
      _
    $region13: #{tpu_custom_call.1} parent=1 // pred_fallthru
      _
    // Predicated region
    $region14: #{tpu_custom_call.1} parent=1 // pred_check
      _
    $region15: #{tpu_custom_call.1} parent=1 // pred_check_branch
      %36 = sbr.rel (0) target = $region17
    $region16: #{tpu_custom_call.1} parent=1 // pred_region
      _
    $region17: #{tpu_custom_call.1} parent=1 // pred_fallthru
      _
    // Predicated region
    $region18: #{tpu_custom_call.1} parent=1 // pred_check
      _
    $region19: #{tpu_custom_call.1} parent=1 // pred_check_branch
      %38 = sbr.rel (0) target = $region21
    $region20: #{tpu_custom_call.1} parent=1 // pred_region
      %39 = dma.done [#allocation4], 128
    $region21: #{tpu_custom_call.1} parent=1 // pred_fallthru
      _
    // Predicated region
    $region22: #{tpu_custom_call.1} parent=1 // pred_check
      _
    $region23: #{tpu_custom_call.1} parent=1 // pred_check_branch
      %41 = sbr.rel (0) target = $region25
    $region24: #{tpu_custom_call.1} parent=1 // pred_region
      %42 = dma.done [#allocation7], 128
    $region25: #{tpu_custom_call.1} parent=1 // pred_fallthru
      _
    %v43 = vld [vmem:[#allocation3] sm:$0xff]
    %v44 = vld [vmem:[#allocation6] sm:$0xff]
    %v45 = vadd.f32 %v43, %v44
    %v46 = vmul.f32 %v45, 0.5
    %v47 = vld [vmem:[%s2] sm:$0x1]
    %v49 = vlaneseq
    %v50 = vshrl.u32 %v49, 7
    %v51 = vsub.s32 0, %v50
    %v52 = vrot.slane %v47, %v51
    %v54 = vmul.f32 %v46, %v52
    %vm55 = vcmask 261120
    %v56 = vsel %vm55, %v54, 0.0
    %57 = vadd.xlane.f32.xlu0 %v56
    %v58 = vpop.xlane.xlu0 %57
    %s59 = sld [smem:[#allocation2]]
    %v60 = vstv %s59
    %v61 = vadd.f32 %v58, %v60
    %v63 = vlaneseq
    %v64 = vand.u32 %v63, 127
    %v65 = vlaneseq
    %v66 = vshrl.u32 %v65, 7
    %v67 = vsub.s32 %v64, %v66
    %v68 = vrot.slane %v61, %v67
    %vm70 = vcmask 57344
    %71 = vst.msk [vmem:[#allocation8] sm:$0x1] %vm70, %v68
    // Predicated region
    $region26: #{tpu_custom_call.1} parent=1 // pred_check
      _
    $region27: #{tpu_custom_call.1} parent=1 // pred_check_branch
      %73 = sbr.rel (0) target = $region29
    $region28: #{tpu_custom_call.1} parent=1 // pred_region
      %s75 = ssub.s32 16, 16
      %76 = vsyncadd [#allocation5], %s75
      %s78 = sshll.u32 [#allocation8], 4
      %s79 = int_to_ptr.vmem [resolvable:$true] %s78
      %81 = dma.vmem_to_hbm [thread:$0]  %s79, 16, %s4, [#allocation5]
    $region29: #{tpu_custom_call.1} parent=1 // pred_fallthru
      _
    // Predicated region
    $region30: #{tpu_custom_call.1} parent=1 // pred_check
      _
    $region31: #{tpu_custom_call.1} parent=1 // pred_check_branch
      %83 = sbr.rel (0) target = $region33
    $region32: #{tpu_custom_call.1} parent=1 // pred_region
      %84 = dma.done [#allocation5], 16
    $region33: #{tpu_custom_call.1} parent=1 // pred_fallthru
      _
    %85 = vsyncpa [#allocation4], 1
    %86 = vsyncpa [#allocation7], 1
    %87 = vsyncpa [#allocation5], 1

</llo_original>
